<compile_context>
chip_gen: v5e
topology: v5e:2x2
jax: 0.10.0
libtpu: 0.0.40
codegen_flags: <defaults>
</compile_context>

<pallas_src>
import numpy as np
import jax
import jax.numpy as jnp
from jax.experimental import pallas as pl
from jax.experimental.pallas import tpu as pltpu

# config values (synthetic, small)
NUM_INPUT = 32          # must be even; each branch sees NUM_INPUT // 2 features
NUM_OUTPUT = 8
HID = 25
TEMP = 5.0
LN_EPS = 1e-5

HALF = NUM_INPUT // 2
LANES = 128

# ---------------------------------------------------------------------------
# Parameter slab layout: biases get 8-row regions, weights get 128-row regions
# (full lane width), so every in-kernel view is (8,128)-tile aligned.
# ---------------------------------------------------------------------------
_BIAS_NAMES = ["ln_g", "ln_b", "b1", "b2", "bu", "ba1c", "ba2", "ba3"]
_WEIGHT_NAMES = ["w1", "w2", "wu", "wa1c", "wa2", "wa3"]

OFF = {}
_r = 0
for _name in _BIAS_NAMES:
    OFF[_name] = _r
    _r += 8
for _name in _WEIGHT_NAMES:
    OFF[_name] = _r
    _r += LANES
SLAB_ROWS = _r  # 8*8 + 6*128 = 832


def _gelu(x):
    # exact (erf-based) GELU, matching torch.nn.GELU() default
    return 0.5 * x * (1.0 + jax.lax.erf(x * np.float32(0.7071067811865476)))


def actor_critic_kernel(x_ref, p_ref, out_ref):
    f32 = jnp.float32
    x = x_ref[...]                                              # (1, 128)

    lane = jax.lax.broadcasted_iota(jnp.int32, (1, LANES), 1)
    is_x1 = lane < HALF

    # ---- LayerNorm on the first HALF lanes (E[x^2] - mean^2 form) ----------
    xm = jnp.where(is_x1, x, 0.0)
    inv_n = np.float32(1.0 / HALF)
    mean = jnp.sum(xm, axis=-1, keepdims=True) * inv_n
    ex2 = jnp.sum(xm * xm, axis=-1, keepdims=True) * inv_n
    var = ex2 - mean * mean
    rstd = jax.lax.rsqrt(var + LN_EPS)

    ln_g = p_ref[OFF["ln_g"]:OFF["ln_g"] + 1, :]
    ln_b = p_ref[OFF["ln_b"]:OFF["ln_b"] + 1, :]
    x1n = (x - mean) * rstd * ln_g + ln_b
    # lanes 0..15: normalized x1, lanes 16..31: raw x2, lanes 32..127: zero
    xcat = jnp.where(is_x1, x1n, x)

    def W(name):
        off = OFF[name]
        return p_ref[off:off + LANES, :]

    def B(name):
        off = OFF[name]
        return p_ref[off:off + 1, :]

    dot = lambda a, b: jnp.dot(a, b, preferred_element_type=f32)

    # ---- fused branch layer 1: block-diag(w_d1, w_l1) ----------------------
    h1 = dot(xcat, W("w1")) + B("b1")
    # GELU on lanes <25 (dist branch), Sigmoid on lanes >=25 (labels branch).
    # Padding lanes >=50 become sigmoid(0)=0.5 but hit all-zero rows of w2.
    h1 = jnp.where(lane < HID, _gelu(h1), jax.nn.sigmoid(h1))

    # ---- fused branch layer 2: block-diag(w_d2, w_l2) -> (out1 | out2) -----
    h2 = dot(h1, W("w2")) + B("b2")

    # ---- unite: Linear(cat([out1, out2])) -> GELU ---------------------------
    u = _gelu(dot(h2, W("wu")) + B("bu"))

    # ---- actor layer 1 fused with critic head -------------------------------
    # columns 0..24 = w_a1, column 25 = w_c
    ac = dot(u, W("wa1c")) + B("ba1c")
    critic = ac[:, HID:HID + 1]            # (1,1) critic (pre-activation)
    a = _gelu(ac)                          # gelu of pad lanes hits zero rows
    a = _gelu(dot(a, W("wa2")) + B("ba2"))
    a = dot(a, W("wa3")) + B("ba3")        # lanes 0..7: actor logits, rest 0

    # ---- single lane-dense output: actor/temp in lanes 0..7, critic lane 8 --
    out = jnp.where(lane < NUM_OUTPUT, a / TEMP,
                    jnp.where(lane == NUM_OUTPUT, critic, 0.0))
    out_ref[...] = out


# ---------------------------------------------------------------------------
# Parameters (torch-default-style init) and slab packing
# ---------------------------------------------------------------------------
def make_params(key):
    def linear(k, fan_in, fan_out):
        k_w, k_b = jax.random.split(k)
        bound = 1.0 / np.sqrt(fan_in)
        w = jax.random.uniform(k_w, (fan_in, fan_out), jnp.float32, -bound, bound)
        b = jax.random.uniform(k_b, (fan_out,), jnp.float32, -bound, bound)
        return w, b

    ks = jax.random.split(key, 9)
    p = {
        "ln_g": jnp.ones((HALF,), jnp.float32),    # torch LayerNorm defaults
        "ln_b": jnp.zeros((HALF,), jnp.float32),
    }
    p["w_d1"], p["b_d1"] = linear(ks[0], HALF, HID)
    p["w_d2"], p["b_d2"] = linear(ks[1], HID, HID)
    p["w_l1"], p["b_l1"] = linear(ks[2], HALF, HID)
    p["w_l2"], p["b_l2"] = linear(ks[3], HID, HID)
    p["w_u"], p["b_u"] = linear(ks[4], 2 * HID, HID)
    p["w_a1"], p["b_a1"] = linear(ks[5], HID, HID)
    p["w_a2"], p["b_a2"] = linear(ks[6], HID, HID)
    p["w_a3"], p["b_a3"] = linear(ks[7], HID, NUM_OUTPUT)
    p["w_c"], p["b_c"] = linear(ks[8], HID, 1)
    return p


def pack_params(p):
    """Pack all parameters into one (SLAB_ROWS, 128) f32 slab (one DMA)."""
    slab = np.zeros((SLAB_ROWS, LANES), np.float32)
    g = lambda name: np.asarray(p[name], np.float32)

    slab[OFF["ln_g"], :HALF] = g("ln_g")
    slab[OFF["ln_b"], :HALF] = g("ln_b")

    # layer 1: block-diag(w_d1, w_l1); input lanes 0..15 -> x1n, 16..31 -> x2
    r = OFF["w1"]
    slab[r:r + HALF, :HID] = g("w_d1")
    slab[r + HALF:r + 2 * HALF, HID:2 * HID] = g("w_l1")
    slab[OFF["b1"], :HID] = g("b_d1")
    slab[OFF["b1"], HID:2 * HID] = g("b_l1")

    # layer 2: block-diag(w_d2, w_l2)
    r = OFF["w2"]
    slab[r:r + HID, :HID] = g("w_d2")
    slab[r + HID:r + 2 * HID, HID:2 * HID] = g("w_l2")
    slab[OFF["b2"], :HID] = g("b_d2")
    slab[OFF["b2"], HID:2 * HID] = g("b_l2")

    # unite
    r = OFF["wu"]
    slab[r:r + 2 * HID, :HID] = g("w_u")
    slab[OFF["bu"], :HID] = g("b_u")

    # actor head layer 1 fused with critic head (extra column at lane HID)
    r = OFF["wa1c"]
    slab[r:r + HID, :HID] = g("w_a1")
    slab[r:r + HID, HID:HID + 1] = g("w_c")
    slab[OFF["ba1c"], :HID] = g("b_a1")
    slab[OFF["ba1c"], HID] = float(np.asarray(p["b_c"]).reshape(-1)[0])

    r = OFF["wa2"]
    slab[r:r + HID, :HID] = g("w_a2")
    slab[OFF["ba2"], :HID] = g("b_a2")

    r = OFF["wa3"]
    slab[r:r + HID, :NUM_OUTPUT] = g("w_a3")
    slab[OFF["ba3"], :NUM_OUTPUT] = g("b_a3")

    return jnp.asarray(slab)


@jax.jit
def actor_critic_forward(x, slab):
    # lane-pad the observation into one (1, 128) row: one input DMA.
    x_row = jnp.zeros((1, LANES), jnp.float32).at[0, :NUM_INPUT].set(x)

    vmem = pltpu.MemorySpace.VMEM
    out = pl.pallas_call(
        actor_critic_kernel,
        out_shape=jax.ShapeDtypeStruct((1, LANES), jnp.float32),
        in_specs=[pl.BlockSpec(memory_space=vmem),
                  pl.BlockSpec(memory_space=vmem)],
        out_specs=pl.BlockSpec(memory_space=vmem),
    )(x_row, slab)

    # match PyTorch output shapes: (NUM_OUTPUT,), (1,)
    actor = out[0, :NUM_OUTPUT]
    critic = out[0, NUM_OUTPUT:NUM_OUTPUT + 1]
    return actor, critic


def reference_forward(x, p):
    """Pure-JAX reference mirroring the PyTorch module exactly."""
    x1 = x[:HALF][None, :]
    x2 = x[HALF:][None, :]

    mean = jnp.mean(x1, axis=-1, keepdims=True)
    xc = x1 - mean
    var = jnp.mean(xc * xc, axis=-1, keepdims=True)
    x1n = xc / jnp.sqrt(var + LN_EPS) * p["ln_g"] + p["ln_b"]

    gelu = lambda v: 0.5 * v * (1.0 + jax.lax.erf(v / np.sqrt(2.0)))
    out1 = gelu(x1n @ p["w_d1"] + p["b_d1"]) @ p["w_d2"] + p["b_d2"]
    out2 = jax.nn.sigmoid(x2 @ p["w_l1"] + p["b_l1"]) @ p["w_l2"] + p["b_l2"]
    u = gelu(jnp.concatenate([out1, out2], axis=-1) @ p["w_u"] + p["b_u"])
    a = gelu(u @ p["w_a1"] + p["b_a1"])
    a = gelu(a @ p["w_a2"] + p["b_a2"])
    a = a @ p["w_a3"] + p["b_a3"]
    c = u @ p["w_c"] + p["b_c"]
    return (a / TEMP).reshape(NUM_OUTPUT), c.reshape(1)


if __name__ == "__main__":
    key = jax.random.PRNGKey(0)
    k_x, k_p = jax.random.split(key)

    x = jax.random.normal(k_x, (NUM_INPUT,), jnp.float32)
    params = make_params(k_p)
    slab = pack_params(params)

    actor, critic = actor_critic_forward(x, slab)
    jax.block_until_ready((actor, critic))

    ref_a, ref_c = reference_forward(x, params)
    np.testing.assert_allclose(np.asarray(actor), np.asarray(ref_a), rtol=1e-5, atol=1e-5)
    np.testing.assert_allclose(np.asarray(critic), np.asarray(ref_c), rtol=1e-5, atol=1e-5)

    print("KERNEL_OK")
</pallas_src>

<mosaic_0001>
module attributes {stable_mosaic.version = 11 : i64} {
  func.func @actor_critic_kernel(%arg0: memref<1x128xf32, #tpu.memory_space<vmem>>, %arg1: memref<832x128xf32, #tpu.memory_space<vmem>>, %arg2: memref<1x128xf32, #tpu.memory_space<vmem>>) attributes {dimension_semantics = [], scalar_prefetch = 0 : i64, scratch_operands = 0 : i64, tpu.core_type = #tpu.core_type<tc>} {
    %c0 = arith.constant 0 : index
    %c0_0 = arith.constant 0 : index
    %0 = vector.load %arg0[%c0, %c0_0] : memref<1x128xf32, #tpu.memory_space<vmem>>, vector<1x128xf32>
    %1 = tpu.iota {dimensions = array<i32: 1>} : vector<1x128xi32>
    %c16_i32 = arith.constant 16 : i32
    %2 = vector.broadcast %c16_i32 : i32 to vector<1x128xi32>
    %3 = arith.cmpi slt, %1, %2 : vector<1x128xi32>
    %cst = arith.constant 0.000000e+00 : f32
    %4 = vector.broadcast %cst : f32 to vector<1x128xf32>
    %5 = arith.select %3, %0, %4 : vector<1x128xi1>, vector<1x128xf32>
    %cst_1 = arith.constant dense<0.000000e+00> : vector<1xf32>
    %6 = vector.multi_reduction <add>, %5, %cst_1 [1] : vector<1x128xf32> to vector<1xf32>
    %7 = vector.shape_cast %6 : vector<1xf32> to vector<1x1xf32>
    %cst_2 = arith.constant 6.250000e-02 : f32
    %8 = vector.broadcast %cst_2 : f32 to vector<1x1xf32>
    %9 = arith.mulf %7, %8 : vector<1x1xf32>
    %10 = arith.mulf %5, %5 : vector<1x128xf32>
    %cst_3 = arith.constant dense<0.000000e+00> : vector<1xf32>
    %11 = vector.multi_reduction <add>, %10, %cst_3 [1] : vector<1x128xf32> to vector<1xf32>
    %12 = vector.shape_cast %11 : vector<1xf32> to vector<1x1xf32>
    %cst_4 = arith.constant 6.250000e-02 : f32
    %13 = vector.broadcast %cst_4 : f32 to vector<1x1xf32>
    %14 = arith.mulf %12, %13 : vector<1x1xf32>
    %15 = arith.mulf %9, %9 : vector<1x1xf32>
    %16 = arith.subf %14, %15 : vector<1x1xf32>
    %cst_5 = arith.constant 9.99999974E-6 : f32
    %17 = vector.broadcast %cst_5 : f32 to vector<1x1xf32>
    %18 = arith.addf %16, %17 : vector<1x1xf32>
    %19 = math.rsqrt %18 : vector<1x1xf32>
    %c0_6 = arith.constant 0 : index
    %c0_7 = arith.constant 0 : index
    %20 = vector.load %arg1[%c0_6, %c0_7] : memref<832x128xf32, #tpu.memory_space<vmem>>, vector<1x128xf32>
    %c8 = arith.constant 8 : index
    %c0_8 = arith.constant 0 : index
    %21 = vector.load %arg1[%c8, %c0_8] : memref<832x128xf32, #tpu.memory_space<vmem>>, vector<1x128xf32>
    %22 = vector.broadcast %9 : vector<1x1xf32> to vector<1x128xf32>
    %23 = arith.subf %0, %22 : vector<1x128xf32>
    %24 = vector.broadcast %19 : vector<1x1xf32> to vector<1x128xf32>
    %25 = arith.mulf %23, %24 : vector<1x128xf32>
    %26 = arith.mulf %25, %20 : vector<1x128xf32>
    %27 = arith.addf %26, %21 : vector<1x128xf32>
    %28 = arith.select %3, %27, %0 : vector<1x128xi1>, vector<1x128xf32>
    %c64 = arith.constant 64 : index
    %c0_9 = arith.constant 0 : index
    %29 = vector.load %arg1[%c64, %c0_9] : memref<832x128xf32, #tpu.memory_space<vmem>>, vector<128x128xf32>
    %cst_10 = arith.constant dense<0.000000e+00> : vector<1x128xf32>
    %30 = tpu.matmul %28, %29, %cst_10 {dimension_numbers = #tpu.dot_dimension_numbers<[1], [0], [0], [1], [0, 0, 1, 1], [], []>} : vector<1x128xf32>, vector<128x128xf32>, vector<1x128xf32> -> vector<1x128xf32>
    %c16 = arith.constant 16 : index
    %c0_11 = arith.constant 0 : index
    %31 = vector.load %arg1[%c16, %c0_11] : memref<832x128xf32, #tpu.memory_space<vmem>>, vector<1x128xf32>
    %32 = arith.addf %30, %31 : vector<1x128xf32>
    %c25_i32 = arith.constant 25 : i32
    %33 = vector.broadcast %c25_i32 : i32 to vector<1x128xi32>
    %34 = arith.cmpi slt, %1, %33 : vector<1x128xi32>
    %cst_12 = arith.constant 5.000000e-01 : f32
    %35 = vector.broadcast %cst_12 : f32 to vector<1x128xf32>
    %36 = arith.mulf %35, %32 : vector<1x128xf32>
    %cst_13 = arith.constant 0.707106769 : f32
    %37 = vector.broadcast %cst_13 : f32 to vector<1x128xf32>
    %38 = arith.mulf %32, %37 : vector<1x128xf32>
    %39 = math.erf %38 : vector<1x128xf32>
    %cst_14 = arith.constant 1.000000e+00 : f32
    %40 = vector.broadcast %cst_14 : f32 to vector<1x128xf32>
    %41 = arith.addf %40, %39 : vector<1x128xf32>
    %42 = arith.mulf %36, %41 : vector<1x128xf32>
    %43 = arith.negf %32 : vector<1x128xf32>
    %44 = math.exp %43 : vector<1x128xf32>
    %cst_15 = arith.constant 1.000000e+00 : f32
    %45 = vector.broadcast %cst_15 : f32 to vector<1x128xf32>
    %46 = arith.addf %45, %44 : vector<1x128xf32>
    %47 = arith.divf %45, %46 : vector<1x128xf32>
    %48 = arith.select %34, %42, %47 : vector<1x128xi1>, vector<1x128xf32>
    %c192 = arith.constant 192 : index
    %c0_16 = arith.constant 0 : index
    %49 = vector.load %arg1[%c192, %c0_16] : memref<832x128xf32, #tpu.memory_space<vmem>>, vector<128x128xf32>
    %cst_17 = arith.constant dense<0.000000e+00> : vector<1x128xf32>
    %50 = tpu.matmul %48, %49, %cst_17 {dimension_numbers = #tpu.dot_dimension_numbers<[1], [0], [0], [1], [0, 0, 1, 1], [], []>} : vector<1x128xf32>, vector<128x128xf32>, vector<1x128xf32> -> vector<1x128xf32>
    %c24 = arith.constant 24 : index
    %c0_18 = arith.constant 0 : index
    %51 = vector.load %arg1[%c24, %c0_18] : memref<832x128xf32, #tpu.memory_space<vmem>>, vector<1x128xf32>
    %52 = arith.addf %50, %51 : vector<1x128xf32>
    %c320 = arith.constant 320 : index
    %c0_19 = arith.constant 0 : index
    %53 = vector.load %arg1[%c320, %c0_19] : memref<832x128xf32, #tpu.memory_space<vmem>>, vector<128x128xf32>
    %cst_20 = arith.constant dense<0.000000e+00> : vector<1x128xf32>
    %54 = tpu.matmul %52, %53, %cst_20 {dimension_numbers = #tpu.dot_dimension_numbers<[1], [0], [0], [1], [0, 0, 1, 1], [], []>} : vector<1x128xf32>, vector<128x128xf32>, vector<1x128xf32> -> vector<1x128xf32>
    %c32 = arith.constant 32 : index
    %c0_21 = arith.constant 0 : index
    %55 = vector.load %arg1[%c32, %c0_21] : memref<832x128xf32, #tpu.memory_space<vmem>>, vector<1x128xf32>
    %56 = arith.addf %54, %55 : vector<1x128xf32>
    %cst_22 = arith.constant 5.000000e-01 : f32
    %57 = vector.broadcast %cst_22 : f32 to vector<1x128xf32>
    %58 = arith.mulf %57, %56 : vector<1x128xf32>
    %cst_23 = arith.constant 0.707106769 : f32
    %59 = vector.broadcast %cst_23 : f32 to vector<1x128xf32>
    %60 = arith.mulf %56, %59 : vector<1x128xf32>
    %61 = math.erf %60 : vector<1x128xf32>
    %cst_24 = arith.constant 1.000000e+00 : f32
    %62 = vector.broadcast %cst_24 : f32 to vector<1x128xf32>
    %63 = arith.addf %62, %61 : vector<1x128xf32>
    %64 = arith.mulf %58, %63 : vector<1x128xf32>
    %c448 = arith.constant 448 : index
    %c0_25 = arith.constant 0 : index
    %65 = vector.load %arg1[%c448, %c0_25] : memref<832x128xf32, #tpu.memory_space<vmem>>, vector<128x128xf32>
    %cst_26 = arith.constant dense<0.000000e+00> : vector<1x128xf32>
    %66 = tpu.matmul %64, %65, %cst_26 {dimension_numbers = #tpu.dot_dimension_numbers<[1], [0], [0], [1], [0, 0, 1, 1], [], []>} : vector<1x128xf32>, vector<128x128xf32>, vector<1x128xf32> -> vector<1x128xf32>
    %c40 = arith.constant 40 : index
    %c0_27 = arith.constant 0 : index
    %67 = vector.load %arg1[%c40, %c0_27] : memref<832x128xf32, #tpu.memory_space<vmem>>, vector<1x128xf32>
    %68 = arith.addf %66, %67 : vector<1x128xf32>
    %69 = vector.extract_strided_slice %68 {offsets = [0, 25], sizes = [1, 1], strides = [1, 1]} : vector<1x128xf32> to vector<1x1xf32>
    %cst_28 = arith.constant 5.000000e-01 : f32
    %70 = vector.broadcast %cst_28 : f32 to vector<1x128xf32>
    %71 = arith.mulf %70, %68 : vector<1x128xf32>
    %cst_29 = arith.constant 0.707106769 : f32
    %72 = vector.broadcast %cst_29 : f32 to vector<1x128xf32>
    %73 = arith.mulf %68, %72 : vector<1x128xf32>
    %74 = math.erf %73 : vector<1x128xf32>
    %cst_30 = arith.constant 1.000000e+00 : f32
    %75 = vector.broadcast %cst_30 : f32 to vector<1x128xf32>
    %76 = arith.addf %75, %74 : vector<1x128xf32>
    %77 = arith.mulf %71, %76 : vector<1x128xf32>
    %c576 = arith.constant 576 : index
    %c0_31 = arith.constant 0 : index
    %78 = vector.load %arg1[%c576, %c0_31] : memref<832x128xf32, #tpu.memory_space<vmem>>, vector<128x128xf32>
    %cst_32 = arith.constant dense<0.000000e+00> : vector<1x128xf32>
    %79 = tpu.matmul %77, %78, %cst_32 {dimension_numbers = #tpu.dot_dimension_numbers<[1], [0], [0], [1], [0, 0, 1, 1], [], []>} : vector<1x128xf32>, vector<128x128xf32>, vector<1x128xf32> -> vector<1x128xf32>
    %c48 = arith.constant 48 : index
    %c0_33 = arith.constant 0 : index
    %80 = vector.load %arg1[%c48, %c0_33] : memref<832x128xf32, #tpu.memory_space<vmem>>, vector<1x128xf32>
    %81 = arith.addf %79, %80 : vector<1x128xf32>
    %cst_34 = arith.constant 5.000000e-01 : f32
    %82 = vector.broadcast %cst_34 : f32 to vector<1x128xf32>
    %83 = arith.mulf %82, %81 : vector<1x128xf32>
    %cst_35 = arith.constant 0.707106769 : f32
    %84 = vector.broadcast %cst_35 : f32 to vector<1x128xf32>
    %85 = arith.mulf %81, %84 : vector<1x128xf32>
    %86 = math.erf %85 : vector<1x128xf32>
    %cst_36 = arith.constant 1.000000e+00 : f32
    %87 = vector.broadcast %cst_36 : f32 to vector<1x128xf32>
    %88 = arith.addf %87, %86 : vector<1x128xf32>
    %89 = arith.mulf %83, %88 : vector<1x128xf32>
    %c704 = arith.constant 704 : index
    %c0_37 = arith.constant 0 : index
    %90 = vector.load %arg1[%c704, %c0_37] : memref<832x128xf32, #tpu.memory_space<vmem>>, vector<128x128xf32>
    %cst_38 = arith.constant dense<0.000000e+00> : vector<1x128xf32>
    %91 = tpu.matmul %89, %90, %cst_38 {dimension_numbers = #tpu.dot_dimension_numbers<[1], [0], [0], [1], [0, 0, 1, 1], [], []>} : vector<1x128xf32>, vector<128x128xf32>, vector<1x128xf32> -> vector<1x128xf32>
    %c56 = arith.constant 56 : index
    %c0_39 = arith.constant 0 : index
    %92 = vector.load %arg1[%c56, %c0_39] : memref<832x128xf32, #tpu.memory_space<vmem>>, vector<1x128xf32>
    %93 = arith.addf %91, %92 : vector<1x128xf32>
    %c8_i32 = arith.constant 8 : i32
    %94 = vector.broadcast %c8_i32 : i32 to vector<1x128xi32>
    %95 = arith.cmpi slt, %1, %94 : vector<1x128xi32>
    %cst_40 = arith.constant 5.000000e+00 : f32
    %96 = vector.broadcast %cst_40 : f32 to vector<1x128xf32>
    %97 = arith.divf %93, %96 : vector<1x128xf32>
    %c8_i32_41 = arith.constant 8 : i32
    %98 = vector.broadcast %c8_i32_41 : i32 to vector<1x128xi32>
    %99 = arith.cmpi eq, %1, %98 : vector<1x128xi32>
    %cst_42 = arith.constant 0.000000e+00 : f32
    %100 = vector.shape_cast %69 : vector<1x1xf32> to vector<1x1xf32>
    %101 = vector.broadcast %100 : vector<1x1xf32> to vector<1x128xf32>
    %102 = vector.broadcast %cst_42 : f32 to vector<1x128xf32>
    %103 = arith.select %99, %101, %102 : vector<1x128xi1>, vector<1x128xf32>
    %104 = arith.select %95, %97, %103 : vector<1x128xi1>, vector<1x128xf32>
    %c0_43 = arith.constant 0 : index
    %c0_44 = arith.constant 0 : index
    %105 = vector.load %arg2[%c0_43, %c0_44] : memref<1x128xf32, #tpu.memory_space<vmem>>, vector<1x128xf32>
    tpu.vector_store %arg2[%c0_43, %c0_44], %104 {strides = array<i32>} : memref<1x128xf32, #tpu.memory_space<vmem>>, vector<1x128xf32>,
    return
  }
}

</mosaic_0001>

<llo_original>
// kernel: actor_critic_forward.1
$region0: #{actor_critic_forward.1}
  #allocation0 [shape = 'u32[]', space=smem, size = 0x4, offset = 0x4, fixed_abs, tag = 'smem constant byte address 0x4 - core index']
  #allocation1 [shape = 'u32[72,128]{1,0:T(1,128)}', space=vmem, size = 0x9000, scoped, tag = 'internal scratch']
  %s0 = inlined_call_operand.vmem [shape: f32[1,128], index: 0, kind: input, shape index: {}]
  %s1 = inlined_call_operand.hbm [shape: f32[832,128], index: 1, kind: input, shape index: {}]
  %s2 = inlined_call_operand.vmem [shape: f32[1,128], index: 2, kind: output, shape index: {}]
  %s3 = sld [smem:[#allocation0]]
  $region22: #{actor_critic_forward.1} parent=0
    _
  %s5 = ssub.s32 1, %s3
  %s6 = scalar_select 0, %s5, %s3
  $region1: #{actor_critic_forward.1} parent=0
    #allocation2 [shape = 'u8[425984]{0}', space=vmem, size = 0x68000, scoped, tag = 'input window, operand 1, single buffered']
    #allocation3 [shape = 's32[1]{0}', space=sflag, size = 0x4, scoped, tag = 'scoped memory for actor_critic_forward.1']
    %7 = vsyncpa [#allocation3], 0
    // Predicated region
    $region2: #{actor_critic_forward.1} parent=1 // pred_check
      _
    $region3: #{actor_critic_forward.1} parent=1 // pred_check_branch
      %9 = sbr.rel (0) target = $region5
    $region4: #{actor_critic_forward.1} parent=1 // pred_region
      _
    $region5: #{actor_critic_forward.1} parent=1 // pred_fallthru
      _
    // Predicated region
    $region6: #{actor_critic_forward.1} parent=1 // pred_check
      _
    $region7: #{actor_critic_forward.1} parent=1 // pred_check_branch
      %11 = sbr.rel (0) target = $region9
    $region8: #{actor_critic_forward.1} parent=1 // pred_region
      %13 = vsyncadd [#allocation3], 0
      %s14 = sshll.u32 %s1, 4
      %s15 = int_to_ptr.hbm [resolvable:$true] %s14
      %s16 = sshll.u32 [#allocation2], 4
      %s17 = int_to_ptr.vmem [resolvable:$true] %s16
      %22 = dma.hbm_to_vmem [thread:$0]  %s15, 13312, %s17, [#allocation3], 128, 128, 8
    $region9: #{actor_critic_forward.1} parent=1 // pred_fallthru
      _
    // Predicated region
    $region10: #{actor_critic_forward.1} parent=1 // pred_check
      _
    $region11: #{actor_critic_forward.1} parent=1 // pred_check_branch
      %24 = sbr.rel (0) target = $region13
    $region12: #{actor_critic_forward.1} parent=1 // pred_region
      %26 = dma.done [#allocation3], 13312
    $region13: #{actor_critic_forward.1} parent=1 // pred_fallthru
      _
    %v27 = vld [vmem:[%s0] sm:$0x1]
    %v28 = vlaneseq
    %v29 = vand.u32 %v28, 127
    %vm30 = vcmp.lt.s32.totalorder %v29, 16
    %v31 = vsel %vm30, %v27, 0.0
    %vm32 = vcmask 1040384
    %v33 = vsel %vm32, %v31, 0.0
    %34 = vadd.xlane.f32.xlu0 %v33
    %v35 = vpop.xlane.xlu0 %34
    %v36 = vmul.f32 %v35, 0.0625
    %v37 = vmul.f32 %v31, %v31
    %v38 = vsel %vm32, %v37, 0.0
    %39 = vadd.xlane.f32.xlu0 %v38
    %v40 = vpop.xlane.xlu0 %39
    %v41 = vmul.f32 %v40, 0.0625
    %v42 = vmul.f32 %v36, %v36
    %v43 = vsub.f32 %v41, %v42
    %v44 = vadd.f32 %v43, 1e-05
    %v45 = vrsqrt.pop %v44
    %v46 = vmul.f32 %v45, %v44
    %v47 = vmul.f32 %v46, %v45
    %v48 = vmul.f32 0.5, %v47
    %v49 = vsub.f32 1.5, %v48
    %v50 = vmul.f32 %v45, %v49
    %vm51 = vweird.f32 %v44
    %vm52 = vweird.f32 %v45
    %vm53 = vmor %vm51, %vm52
    %v54 = vsel %vm53, %v45, %v50
    %v55 = vld [vmem:[#allocation2] sm:$0x1]
    %v56 = vld [vmem:[#allocation2 + $0x8] sm:$0x1]
    %v57 = vsub.f32 %v27, %v36
    %v58 = vmul.f32 %v57, %v54
    %v59 = vmul.f32 %v58, %v55
    %v60 = vadd.f32 %v59, %v56
    %v61 = vsel %vm30, %v60, %v27
    %v62 = vld [vmem:[#allocation2 + $0x40] sm:$0xff]
    %v63 = vld [vmem:[#allocation2 + $0x48] sm:$0xff]
    %v64 = vld [vmem:[#allocation2 + $0x50] sm:$0xff]
    %v65 = vld [vmem:[#allocation2 + $0x58] sm:$0xff]
    %v66 = vld [vmem:[#allocation2 + $0x60] sm:$0xff]
    %v67 = vld [vmem:[#allocation2 + $0x68] sm:$0xff]
    %v68 = vld [vmem:[#allocation2 + $0x70] sm:$0xff]
    %v69 = vld [vmem:[#allocation2 + $0x78] sm:$0xff]
    %v70 = vld [vmem:[#allocation2 + $0x80] sm:$0xff]
    %v71 = vld [vmem:[#allocation2 + $0x88] sm:$0xff]
    %v72 = vld [vmem:[#allocation2 + $0x90] sm:$0xff]
    %v73 = vld [vmem:[#allocation2 + $0x98] sm:$0xff]
    %v74 = vld [vmem:[#allocation2 + $0xa0] sm:$0xff]
    %v75 = vld [vmem:[#allocation2 + $0xa8] sm:$0xff]
    %v76 = vld [vmem:[#allocation2 + $0xb0] sm:$0xff]
    %v77 = vld [vmem:[#allocation2 + $0xb8] sm:$0xff]
    %v78 = vld [vmem:[#allocation2 + $0x10] sm:$0x1]
    %79 = vmatpush.msra.mxu0 %v77
    %80 = vmatpush.msra.mxu0 %v76
    %81 = vmatpush.msra.mxu0 %v75
    %82 = vmatpush.msra.mxu0 %v74
    %83 = vmatpush.msra.mxu0 %v73
    %84 = vmatpush.msra.mxu0 %v72
    %85 = vmatpush.msra.mxu0 %v71
    %86 = vmatpush.msra.mxu0 %v70
    %87 = vmatpush.msra.mxu0 %v69
    %88 = vmatpush.msra.mxu0 %v68
    %89 = vmatpush.msra.mxu0 %v67
    %90 = vmatpush.msra.mxu0 %v66
    %91 = vmatpush.msra.mxu0 %v65
    %92 = vmatpush.msra.mxu0 %v64
    %93 = vmatpush.msra.mxu0 %v63
    %94 = vmatpush.msra.mxu0 %v62
    %95 = vmatmul.f32.gmra.mxu0 %v61
    %v96 = vpop.f32.mrf.mxu0
    %v97 = vadd.f32 %v78, %v96
    %98 = vdwg.mxu0
    %vm99 = vcmp.lt.s32.totalorder %v29, 25
    %v100 = vmul.f32 %v97, 0.5
    %v101 = vmul.f32 %v97, 0.70710677
    %v102 = vmul.f32 %v101, %v101
    %v103 = vmin.f32 16.0, %v102
    %v104 = vmul.f32 %v103, 2.1237322e-06
    %v105 = vadd.f32 %v104, 0.00028619796
    %v106 = vmul.f32 %v103, %v105
    %v107 = vadd.f32 %v106, 0.0036580483
    %v108 = vmul.f32 %v103, %v107
    %v109 = vadd.f32 %v108, 0.05243302
    %v110 = vmul.f32 %v103, %v109
    %v111 = vadd.f32 %v110, 0.18741608
    %v112 = vmul.f32 %v103, %v111
    %v113 = vadd.f32 %v112, 1.1283791
    %v114 = vmul.f32 %v101, %v113
    %v115 = vmul.f32 %v103, 3.8918573e-05
    %v116 = vadd.f32 %v115, 0.001143296
    %v117 = vmul.f32 %v103, %v116
    %v118 = vadd.f32 %v117, 0.014752088
    %v119 = vmul.f32 %v103, %v118
    %v120 = vadd.f32 %v119, 0.112945676
    %v121 = vmul.f32 %v103, %v120
    %v122 = vadd.f32 %v121, 0.4994258
    %v123 = vmul.f32 %v103, %v122
    %v124 = vadd.f32 %v123, 1.0
    %v125 = vrcp.pop %v124
    %v126 = vmul.f32 %v124, %v125
    %v127 = vsub.f32 1.0, %v126
    %v128 = vmul.f32 %v125, %v127
    %v129 = vadd.f32 %v125, %v128
    %vm130 = vweird.f32 %v124
    %vm131 = vweird.f32 %v125
    %vm132 = vmor %vm130, %vm131
    %v133 = vsel %vm132, %v125, %v129
    %v134 = vand.u32 2147483647, %v124
    %vm135 = vcmp.eq.f32.partialorder %v134, 8.507059e+37
    %v136 = vand.u32 %v124, 2147483648
    %v137 = vor.u32 1.1754944e-38, %v136
    %v138 = vsel %vm135, %v137, %v133
    %v139 = vmul.f32 %v114, %v138
    %v140 = vmin.f32 %v139, 1.0
    %v141 = vmax.f32 %v140, -1.0
    %v142 = vadd.f32 %v141, 1.0
    %v143 = vmul.f32 %v100, %v142
    %v144 = vxor.u32 %v97, 2147483648
    %v145 = vmul.f32 %v144, 1.442695
    %v146 = vpow.pop %v145
    %v147 = vadd.f32 %v146, 1.0
    %v148 = vrcp.pop %v147
    %v149 = vmul.f32 %v147, %v148
    %v150 = vsub.f32 1.0, %v149
    %v151 = vmul.f32 %v148, %v150
    %v152 = vadd.f32 %v148, %v151
    %vm153 = vweird.f32 %v147
    %vm154 = vweird.f32 %v148
    %vm155 = vmor %vm153, %vm154
    %v156 = vsel %vm155, %v148, %v152
    %v157 = vand.u32 2147483647, %v147
    %vm158 = vcmp.eq.f32.partialorder %v157, 8.507059e+37
    %v159 = vand.u32 %v147, 2147483648
    %v160 = vor.u32 1.1754944e-38, %v159
    %v161 = vsel %vm158, %v160, %v156
    %v162 = vmul.f32 1.0, %v161
    %v163 = vsel %vm99, %v143, %v162
    %v164 = vld [vmem:[#allocation2 + $0xc0] sm:$0xff]
    %v165 = vld [vmem:[#allocation2 + $0xc8] sm:$0xff]
    %v166 = vld [vmem:[#allocation2 + $0xd0] sm:$0xff]
    %v167 = vld [vmem:[#allocation2 + $0xd8] sm:$0xff]
    %v168 = vld [vmem:[#allocation2 + $0xe0] sm:$0xff]
    %v169 = vld [vmem:[#allocation2 + $0xe8] sm:$0xff]
    %v170 = vld [vmem:[#allocation2 + $0xf0] sm:$0xff]
    %v171 = vld [vmem:[#allocation2 + $0xf8] sm:$0xff]
    %v172 = vld [vmem:[#allocation2 + $0x100] sm:$0xff]
    %v173 = vld [vmem:[#allocation2 + $0x108] sm:$0xff]
    %v174 = vld [vmem:[#allocation2 + $0x110] sm:$0xff]
    %v175 = vld [vmem:[#allocation2 + $0x118] sm:$0xff]
    %v176 = vld [vmem:[#allocation2 + $0x120] sm:$0xff]
    %v177 = vld [vmem:[#allocation2 + $0x128] sm:$0xff]
    %v178 = vld [vmem:[#allocation2 + $0x130] sm:$0xff]
    %v179 = vld [vmem:[#allocation2 + $0x138] sm:$0xff]
    %v180 = vld [vmem:[#allocation2 + $0x18] sm:$0x1]
    %181 = vmatpush.msra.mxu0 %v179
    %182 = vmatpush.msra.mxu0 %v178
    %183 = vmatpush.msra.mxu0 %v177
    %184 = vmatpush.msra.mxu0 %v176
    %185 = vmatpush.msra.mxu0 %v175
    %186 = vmatpush.msra.mxu0 %v174
    %187 = vmatpush.msra.mxu0 %v173
    %188 = vmatpush.msra.mxu0 %v172
    %189 = vmatpush.msra.mxu0 %v171
    %190 = vmatpush.msra.mxu0 %v170
    %191 = vmatpush.msra.mxu0 %v169
    %192 = vmatpush.msra.mxu0 %v168
    %193 = vmatpush.msra.mxu0 %v167
    %194 = vmatpush.msra.mxu0 %v166
    %195 = vmatpush.msra.mxu0 %v165
    %196 = vmatpush.msra.mxu0 %v164
    %197 = vmatmul.f32.gmra.mxu0 %v163
    %v198 = vpop.f32.mrf.mxu0
    %v199 = vadd.f32 %v180, %v198
    %200 = vdwg.mxu0
    %v201 = vld [vmem:[#allocation2 + $0x140] sm:$0xff]
    %v202 = vld [vmem:[#allocation2 + $0x148] sm:$0xff]
    %v203 = vld [vmem:[#allocation2 + $0x150] sm:$0xff]
    %v204 = vld [vmem:[#allocation2 + $0x158] sm:$0xff]
    %v205 = vld [vmem:[#allocation2 + $0x160] sm:$0xff]
    %v206 = vld [vmem:[#allocation2 + $0x168] sm:$0xff]
    %v207 = vld [vmem:[#allocation2 + $0x170] sm:$0xff]
    %v208 = vld [vmem:[#allocation2 + $0x178] sm:$0xff]
    %v209 = vld [vmem:[#allocation2 + $0x180] sm:$0xff]
    %v210 = vld [vmem:[#allocation2 + $0x188] sm:$0xff]
    %v211 = vld [vmem:[#allocation2 + $0x190] sm:$0xff]
    %v212 = vld [vmem:[#allocation2 + $0x198] sm:$0xff]
    %v213 = vld [vmem:[#allocation2 + $0x1a0] sm:$0xff]
    %v214 = vld [vmem:[#allocation2 + $0x1a8] sm:$0xff]
    %v215 = vld [vmem:[#allocation2 + $0x1b0] sm:$0xff]
    %v216 = vld [vmem:[#allocation2 + $0x1b8] sm:$0xff]
    %v217 = vld [vmem:[#allocation2 + $0x20] sm:$0x1]
    %218 = vmatpush.msra.mxu0 %v216
    %219 = vmatpush.msra.mxu0 %v215
    %220 = vmatpush.msra.mxu0 %v214
    %221 = vmatpush.msra.mxu0 %v213
    %222 = vmatpush.msra.mxu0 %v212
    %223 = vmatpush.msra.mxu0 %v211
    %224 = vmatpush.msra.mxu0 %v210
    %225 = vmatpush.msra.mxu0 %v209
    %226 = vmatpush.msra.mxu0 %v208
    %227 = vmatpush.msra.mxu0 %v207
    %228 = vmatpush.msra.mxu0 %v206
    %229 = vmatpush.msra.mxu0 %v205
    %230 = vmatpush.msra.mxu0 %v204
    %231 = vmatpush.msra.mxu0 %v203
    %232 = vmatpush.msra.mxu0 %v202
    %233 = vmatpush.msra.mxu0 %v201
    %234 = vmatmul.f32.gmra.mxu0 %v199
    %v235 = vpop.f32.mrf.mxu0
    %v236 = vadd.f32 %v217, %v235
    %237 = vdwg.mxu0
    %v238 = vmul.f32 %v236, 0.5
    %v239 = vmul.f32 %v236, 0.70710677
    %v240 = vmul.f32 %v239, %v239
    %v241 = vmin.f32 16.0, %v240
    %v242 = vmul.f32 %v241, 2.1237322e-06
    %v243 = vadd.f32 %v242, 0.00028619796
    %v244 = vmul.f32 %v241, %v243
    %v245 = vadd.f32 %v244, 0.0036580483
    %v246 = vmul.f32 %v241, %v245
    %v247 = vadd.f32 %v246, 0.05243302
    %v248 = vmul.f32 %v241, %v247
    %v249 = vadd.f32 %v248, 0.18741608
    %v250 = vmul.f32 %v241, %v249
    %v251 = vadd.f32 %v250, 1.1283791
    %v252 = vmul.f32 %v239, %v251
    %v253 = vmul.f32 %v241, 3.8918573e-05
    %v254 = vadd.f32 %v253, 0.001143296
    %v255 = vmul.f32 %v241, %v254
    %v256 = vadd.f32 %v255, 0.014752088
    %v257 = vmul.f32 %v241, %v256
    %v258 = vadd.f32 %v257, 0.112945676
    %v259 = vmul.f32 %v241, %v258
    %v260 = vadd.f32 %v259, 0.4994258
    %v261 = vmul.f32 %v241, %v260
    %v262 = vadd.f32 %v261, 1.0
    %v263 = vrcp.pop %v262
    %v264 = vmul.f32 %v262, %v263
    %v265 = vsub.f32 1.0, %v264
    %v266 = vmul.f32 %v263, %v265
    %v267 = vadd.f32 %v263, %v266
    %vm268 = vweird.f32 %v262
    %vm269 = vweird.f32 %v263
    %vm270 = vmor %vm268, %vm269
    %v271 = vsel %vm270, %v263, %v267
    %v272 = vand.u32 2147483647, %v262
    %vm273 = vcmp.eq.f32.partialorder %v272, 8.507059e+37
    %v274 = vand.u32 %v262, 2147483648
    %v275 = vor.u32 1.1754944e-38, %v274
    %v276 = vsel %vm273, %v275, %v271
    %v277 = vmul.f32 %v252, %v276
    %v278 = vmin.f32 %v277, 1.0
    %v279 = vmax.f32 %v278, -1.0
    %v280 = vadd.f32 %v279, 1.0
    %v281 = vmul.f32 %v238, %v280
    %v282 = vld [vmem:[#allocation2 + $0x1c0] sm:$0xff]
    %v283 = vld [vmem:[#allocation2 + $0x1c8] sm:$0xff]
    %v284 = vld [vmem:[#allocation2 + $0x1d0] sm:$0xff]
    %v285 = vld [vmem:[#allocation2 + $0x1d8] sm:$0xff]
    %v286 = vld [vmem:[#allocation2 + $0x1e0] sm:$0xff]
    %v287 = vld [vmem:[#allocation2 + $0x1e8] sm:$0xff]
    %v288 = vld [vmem:[#allocation2 + $0x1f0] sm:$0xff]
    %v289 = vld [vmem:[#allocation2 + $0x1f8] sm:$0xff]
    %v290 = vld [vmem:[#allocation2 + $0x200] sm:$0xff]
    %v291 = vld [vmem:[#allocation2 + $0x208] sm:$0xff]
    %v292 = vld [vmem:[#allocation2 + $0x210] sm:$0xff]
    %v293 = vld [vmem:[#allocation2 + $0x218] sm:$0xff]
    %v294 = vld [vmem:[#allocation2 + $0x220] sm:$0xff]
    %v295 = vld [vmem:[#allocation2 + $0x228] sm:$0xff]
    %v296 = vld [vmem:[#allocation2 + $0x230] sm:$0xff]
    %v297 = vld [vmem:[#allocation2 + $0x238] sm:$0xff]
    %v298 = vld [vmem:[#allocation2 + $0x28] sm:$0x1]
    %299 = vmatpush.msra.mxu0 %v297
    %300 = vmatpush.msra.mxu0 %v296
    %301 = vmatpush.msra.mxu0 %v295
    %302 = vmatpush.msra.mxu0 %v294
    %303 = vmatpush.msra.mxu0 %v293
    %304 = vmatpush.msra.mxu0 %v292
    %305 = vmatpush.msra.mxu0 %v291
    %306 = vmatpush.msra.mxu0 %v290
    %307 = vmatpush.msra.mxu0 %v289
    %308 = vmatpush.msra.mxu0 %v288
    %309 = vmatpush.msra.mxu0 %v287
    %310 = vmatpush.msra.mxu0 %v286
    %311 = vmatpush.msra.mxu0 %v285
    %312 = vmatpush.msra.mxu0 %v284
    %313 = vmatpush.msra.mxu0 %v283
    %314 = vmatpush.msra.mxu0 %v282
    %315 = vmatmul.f32.gmra.mxu0 %v281
    %v316 = vpop.f32.mrf.mxu0
    %v317 = vadd.f32 %v298, %v316
    %318 = vdwg.mxu0
    %v319 = vmul.f32 %v317, 0.5
    %v320 = vmul.f32 %v317, 0.70710677
    %v321 = vmul.f32 %v320, %v320
    %v322 = vmin.f32 16.0, %v321
    %v323 = vmul.f32 %v322, 2.1237322e-06
    %v324 = vadd.f32 %v323, 0.00028619796
    %v325 = vmul.f32 %v322, %v324
    %v326 = vadd.f32 %v325, 0.0036580483
    %v327 = vmul.f32 %v322, %v326
    %v328 = vadd.f32 %v327, 0.05243302
    %v329 = vmul.f32 %v322, %v328
    %v330 = vadd.f32 %v329, 0.18741608
    %v331 = vmul.f32 %v322, %v330
    %v332 = vadd.f32 %v331, 1.1283791
    %v333 = vmul.f32 %v320, %v332
    %v334 = vmul.f32 %v322, 3.8918573e-05
    %v335 = vadd.f32 %v334, 0.001143296
    %v336 = vmul.f32 %v322, %v335
    %v337 = vadd.f32 %v336, 0.014752088
    %v338 = vmul.f32 %v322, %v337
    %v339 = vadd.f32 %v338, 0.112945676
    %v340 = vmul.f32 %v322, %v339
    %v341 = vadd.f32 %v340, 0.4994258
    %v342 = vmul.f32 %v322, %v341
    %v343 = vadd.f32 %v342, 1.0
    %v344 = vrcp.pop %v343
    %v345 = vmul.f32 %v343, %v344
    %v346 = vsub.f32 1.0, %v345
    %v347 = vmul.f32 %v344, %v346
    %v348 = vadd.f32 %v344, %v347
    %vm349 = vweird.f32 %v343
    %vm350 = vweird.f32 %v344
    %vm351 = vmor %vm349, %vm350
    %v352 = vsel %vm351, %v344, %v348
    %v353 = vand.u32 2147483647, %v343
    %vm354 = vcmp.eq.f32.partialorder %v353, 8.507059e+37
    %v355 = vand.u32 %v343, 2147483648
    %v356 = vor.u32 1.1754944e-38, %v355
    %v357 = vsel %vm354, %v356, %v352
    %v358 = vmul.f32 %v333, %v357
    %v359 = vmin.f32 %v358, 1.0
    %v360 = vmax.f32 %v359, -1.0
    %v361 = vadd.f32 %v360, 1.0
    %v362 = vmul.f32 %v319, %v361
    %v363 = vld [vmem:[#allocation2 + $0x240] sm:$0xff]
    %v364 = vld [vmem:[#allocation2 + $0x248] sm:$0xff]
    %v365 = vld [vmem:[#allocation2 + $0x250] sm:$0xff]
    %v366 = vld [vmem:[#allocation2 + $0x258] sm:$0xff]
    %v367 = vld [vmem:[#allocation2 + $0x260] sm:$0xff]
    %v368 = vld [vmem:[#allocation2 + $0x268] sm:$0xff]
    %v369 = vld [vmem:[#allocation2 + $0x270] sm:$0xff]
    %v370 = vld [vmem:[#allocation2 + $0x278] sm:$0xff]
    %v371 = vld [vmem:[#allocation2 + $0x280] sm:$0xff]
    %v372 = vld [vmem:[#allocation2 + $0x288] sm:$0xff]
    %v373 = vld [vmem:[#allocation2 + $0x290] sm:$0xff]
    %v374 = vld [vmem:[#allocation2 + $0x298] sm:$0xff]
    %v375 = vld [vmem:[#allocation2 + $0x2a0] sm:$0xff]
    %v376 = vld [vmem:[#allocation2 + $0x2a8] sm:$0xff]
    %v377 = vld [vmem:[#allocation2 + $0x2b0] sm:$0xff]
    %v378 = vld [vmem:[#allocation2 + $0x2b8] sm:$0xff]
    %v379 = vld [vmem:[#allocation2 + $0x30] sm:$0x1]
    %380 = vmatpush.msra.mxu0 %v378
    %381 = vmatpush.msra.mxu0 %v377
    %382 = vmatpush.msra.mxu0 %v376
    %383 = vmatpush.msra.mxu0 %v375
    %384 = vmatpush.msra.mxu0 %v374
    %385 = vmatpush.msra.mxu0 %v373
    %386 = vmatpush.msra.mxu0 %v372
    %387 = vmatpush.msra.mxu0 %v371
    %388 = vmatpush.msra.mxu0 %v370
    %389 = vmatpush.msra.mxu0 %v369
    %390 = vmatpush.msra.mxu0 %v368
    %391 = vmatpush.msra.mxu0 %v367
    %392 = vmatpush.msra.mxu0 %v366
    %393 = vmatpush.msra.mxu0 %v365
    %394 = vmatpush.msra.mxu0 %v364
    %395 = vmatpush.msra.mxu0 %v363
    %396 = vmatmul.f32.gmra.mxu0 %v362
    %v397 = vpop.f32.mrf.mxu0
    %v398 = vadd.f32 %v379, %v397
    %399 = vdwg.mxu0
    %v400 = vmul.f32 %v398, 0.5
    %v401 = vmul.f32 %v398, 0.70710677
    %v402 = vmul.f32 %v401, %v401
    %v403 = vmin.f32 16.0, %v402
    %v404 = vmul.f32 %v403, 2.1237322e-06
    %v405 = vadd.f32 %v404, 0.00028619796
    %v406 = vmul.f32 %v403, %v405
    %v407 = vadd.f32 %v406, 0.0036580483
    %v408 = vmul.f32 %v403, %v407
    %v409 = vadd.f32 %v408, 0.05243302
    %v410 = vmul.f32 %v403, %v409
    %v411 = vadd.f32 %v410, 0.18741608
    %v412 = vmul.f32 %v403, %v411
    %v413 = vadd.f32 %v412, 1.1283791
    %v414 = vmul.f32 %v401, %v413
    %v415 = vmul.f32 %v403, 3.8918573e-05
    %v416 = vadd.f32 %v415, 0.001143296
    %v417 = vmul.f32 %v403, %v416
    %v418 = vadd.f32 %v417, 0.014752088
    %v419 = vmul.f32 %v403, %v418
    %v420 = vadd.f32 %v419, 0.112945676
    %v421 = vmul.f32 %v403, %v420
    %v422 = vadd.f32 %v421, 0.4994258
    %v423 = vmul.f32 %v403, %v422
    %v424 = vadd.f32 %v423, 1.0
    %v425 = vrcp.pop %v424
    %v426 = vmul.f32 %v424, %v425
    %v427 = vsub.f32 1.0, %v426
    %v428 = vmul.f32 %v425, %v427
    %v429 = vadd.f32 %v425, %v428
    %vm430 = vweird.f32 %v424
    %vm431 = vweird.f32 %v425
    %vm432 = vmor %vm430, %vm431
    %v433 = vsel %vm432, %v425, %v429
    %v434 = vand.u32 2147483647, %v424
    %vm435 = vcmp.eq.f32.partialorder %v434, 8.507059e+37
    %v436 = vand.u32 %v424, 2147483648
    %v437 = vor.u32 1.1754944e-38, %v436
    %v438 = vsel %vm435, %v437, %v433
    %v439 = vmul.f32 %v414, %v438
    %v440 = vmin.f32 %v439, 1.0
    %v441 = vmax.f32 %v440, -1.0
    %v442 = vadd.f32 %v441, 1.0
    %v443 = vmul.f32 %v400, %v442
    %v444 = vld [vmem:[#allocation2 + $0x2c0] sm:$0xff]
    %v445 = vld [vmem:[#allocation2 + $0x2c8] sm:$0xff]
    %v446 = vld [vmem:[#allocation2 + $0x2d0] sm:$0xff]
    %v447 = vld [vmem:[#allocation2 + $0x2d8] sm:$0xff]
    %v448 = vld [vmem:[#allocation2 + $0x2e0] sm:$0xff]
    %v449 = vld [vmem:[#allocation2 + $0x2e8] sm:$0xff]
    %v450 = vld [vmem:[#allocation2 + $0x2f0] sm:$0xff]
    %v451 = vld [vmem:[#allocation2 + $0x2f8] sm:$0xff]
    %v452 = vld [vmem:[#allocation2 + $0x300] sm:$0xff]
    %v453 = vld [vmem:[#allocation2 + $0x308] sm:$0xff]
    %v454 = vld [vmem:[#allocation2 + $0x310] sm:$0xff]
    %v455 = vld [vmem:[#allocation2 + $0x318] sm:$0xff]
    %v456 = vld [vmem:[#allocation2 + $0x320] sm:$0xff]
    %v457 = vld [vmem:[#allocation2 + $0x328] sm:$0xff]
    %v458 = vld [vmem:[#allocation2 + $0x330] sm:$0xff]
    %v459 = vld [vmem:[#allocation2 + $0x338] sm:$0xff]
    %v460 = vld [vmem:[#allocation2 + $0x38] sm:$0x1]
    %461 = vmatpush.msra.mxu0 %v459
    %462 = vmatpush.msra.mxu0 %v458
    %463 = vmatpush.msra.mxu0 %v457
    %464 = vmatpush.msra.mxu0 %v456
    %465 = vmatpush.msra.mxu0 %v455
    %466 = vmatpush.msra.mxu0 %v454
    %467 = vmatpush.msra.mxu0 %v453
    %468 = vmatpush.msra.mxu0 %v452
    %469 = vmatpush.msra.mxu0 %v451
    %470 = vmatpush.msra.mxu0 %v450
    %471 = vmatpush.msra.mxu0 %v449
    %472 = vmatpush.msra.mxu0 %v448
    %473 = vmatpush.msra.mxu0 %v447
    %474 = vmatpush.msra.mxu0 %v446
    %475 = vmatpush.msra.mxu0 %v445
    %476 = vmatpush.msra.mxu0 %v444
    %477 = vmatmul.f32.gmra.mxu0 %v443
    %v478 = vpop.f32.mrf.mxu0
    %v479 = vadd.f32 %v460, %v478
    %480 = vdwg.mxu0
    %vm481 = vcmp.lt.s32.totalorder %v29, 8
    %v482 = vrcp.pop 5.0
    %v483 = vmul.f32 5.0, %v482
    %v484 = vsub.f32 1.0, %v483
    %v485 = vmul.f32 %v482, %v484
    %v486 = vadd.f32 %v482, %v485
    %vm487 = vweird.f32 %v482
    %v488 = vsel %vm487, %v482, %v486
    %v489 = vmul.f32 %v479, %v488
    %vm490 = vcmp.eq.s32.totalorder %v29, 8
    %492 = vset.pattern.permute.xlu0 25
    %493 = vperm.xlu0 %492, %v317
    %v494 = vpop.permute.xlu0 %493
    %v496 = vsel %vm490, %v494, 0.0
    %v497 = vsel %vm481, %v489, %v496
    %498 = vst [vmem:[%s2] sm:$0x1] %v497
    // Predicated region
    $region14: #{actor_critic_forward.1} parent=1 // pred_check
      _
    $region15: #{actor_critic_forward.1} parent=1 // pred_check_branch
      %500 = sbr.rel (0) target = $region17
    $region16: #{actor_critic_forward.1} parent=1 // pred_region
      _
    $region17: #{actor_critic_forward.1} parent=1 // pred_fallthru
      _
    // Predicated region
    $region18: #{actor_critic_forward.1} parent=1 // pred_check
      _
    $region19: #{actor_critic_forward.1} parent=1 // pred_check_branch
      %502 = sbr.rel (0) target = $region21
    $region20: #{actor_critic_forward.1} parent=1 // pred_region
      _
    $region21: #{actor_critic_forward.1} parent=1 // pred_fallthru
      _
    %503 = vsyncpa [#allocation3], 1

</llo_original>
